<compile_context>
chip_gen: v7x
topology: tpu7x:2x2x1
jax: 0.10.0
libtpu: 0.0.40
codegen_flags: <defaults>
</compile_context>

<pallas_src>
import functools

import jax
import jax.numpy as jnp
from jax.experimental import pallas as pl
from jax.experimental.pallas import tpu as pltpu


def _round_up(x, m):
    return ((x + m - 1) // m) * m


def _maxpool_strip_kernel(x_ref, o_ref, *, ow, kw):
    # x_ref: (r, kh, OW*kw) — r independent, lane-dense horizontal window strips.
    # 1) Reduce the kh window rows (sublane axis): elementwise VPU maxes across
    #    the sublane tiles plus one small in-vreg reduce per lane column.
    rows = jnp.max(x_ref[...], axis=1)                       # (r, OW*kw)
    # 2) Per output column: one cheap cross-lane (XLU) max over kw lanes on the
    #    kh-times-smaller intermediate. Static slices only (no in-kernel reshape).
    for o in range(ow):
        seg = rows[:, o * kw:(o + 1) * kw]                   # (r, kw)
        o_ref[:, o:o + 1] = jnp.max(seg, axis=-1, keepdims=True)


def max_pool2d_nchw(x, kh, kw):
    """nn.MaxPool2d((kh, kw)) with PyTorch defaults: stride=kernel, padding=0, floor mode."""
    N, C, H, W = x.shape
    OH, OW = H // kh, W // kw
    assert OH >= 1 and OW >= 1, "spatial dims must be >= pooling window"

    # Floor-mode crop; identity (and therefore copy-free together with the
    # reshape below) whenever H and W are multiples of the window, the typical
    # case for a 50x50 pool.
    # TODO(synk): fold the crop into the BlockSpec index_map to avoid one extra
    # HBM pass when H or W is not a multiple of the window.
    xc = x[:, :, : OH * kh, : OW * kw]
    ncoh = N * C * OH
    lane = OW * kw
    # Contiguity-preserving regroup: one leading index == one horizontal strip
    # of pooling windows; last dim is lane-dense.
    xr = xc.reshape(ncoh, kh, lane)

    itemsize = jnp.dtype(x.dtype).itemsize
    sub = {4: 8, 2: 16, 1: 32}.get(itemsize, 8)       # min sublane tile per dtype
    # (sub, 128)-padded VMEM bytes of one leading row of a block.
    padded_row_bytes = _round_up(kh, sub) * _round_up(lane, 128) * itemsize

    if ncoh <= sub:
        r = ncoh                                      # block covers the full leading dim
    else:
        # ~5 MiB padded per block: large enough that the ~0.35us per-step cost
        # is noise and the kernel sits at the HBM roofline, small enough that
        # the double-buffered input + output fits every generation's scoped VMEM.
        r = max(sub, ((5 << 20) // padded_row_bytes) // sub * sub)
        # >= 4 grid steps (>= 2 per v7x TensorCore) when there is enough work,
        # so BlockSpec double-buffering overlaps DMA with the reduce on both
        # cores; on single-TC v5e/v6e the extra step boundaries cost ~1us total.
        if ncoh >= 4 * sub:
            r = min(r, max(sub, (ncoh // 4) // sub * sub))
        r = min(r, (ncoh // sub) * sub)               # keep r <= ncoh (multiple of sub)
    # TODO(synk): for extremely wide images (lane*itemsize*sub*2 > vmem limit)
    # the lane axis itself would need a grid split; not needed for realistic sizes.

    grid = (pl.cdiv(ncoh, r),)                        # ragged last block, no jnp.pad
    out = pl.pallas_call(
        functools.partial(_maxpool_strip_kernel, ow=OW, kw=kw),
        out_shape=jax.ShapeDtypeStruct((ncoh, OW), x.dtype),
        grid=grid,
        in_specs=[pl.BlockSpec((r, kh, lane), lambda i: (i, 0, 0))],
        out_specs=pl.BlockSpec((r, OW), lambda i: (i, 0)),
        compiler_params=pltpu.CompilerParams(
            dimension_semantics=("parallel",),
            vmem_limit_bytes=32 * 1024 * 1024),
        cost_estimate=pl.CostEstimate(
            flops=ncoh * kh * lane,                   # one compare per input element
            transcendentals=0,
            bytes_accessed=ncoh * kh * lane * itemsize + ncoh * OW * itemsize),
    )(xr)
    return out.reshape(N, C, OH, OW)


def downsize_block_forward(x, downsize_mode=2):
    # TODO(synk): downsize_mode 0 (Conv2d k=50/s=50 + BN + ReLU) and 1
    # (AdaptiveAvgPool2d((16, 16))) are not implemented; the module default
    # (downsize_mode=2 -> MaxPool2d((50, 50))) is what forward() uses.
    assert downsize_mode == 2
    return max_pool2d_nchw(x, 50, 50)


if __name__ == "__main__":
    key = jax.random.PRNGKey(0)
    # MaxPool2d((50, 50)) needs spatial dims >= 50; 125x110 also exercises the
    # floor-mode (ceil_mode=False) truncation of trailing rows/cols.
    x = jax.random.normal(key, (2, 4, 125, 110), jnp.float32)
    fwd = jax.jit(downsize_block_forward)
    y = jax.block_until_ready(fwd(x))
    assert y.shape == (2, 4, 2, 2), y.shape
    ref = x[:, :, :100, :100].reshape(2, 4, 2, 50, 2, 50).max(axis=(3, 5))
    assert jnp.allclose(y, ref), float(jnp.max(jnp.abs(y - ref)))
    assert bool(jnp.all(jnp.isfinite(y)))

    # Exact-multiple case (no crop, fully copy-free wrapper path).
    x2 = jax.random.normal(jax.random.PRNGKey(0), (1, 3, 100, 150), jnp.float32)
    y2 = jax.block_until_ready(fwd(x2))
    ref2 = x2.reshape(1, 3, 2, 50, 3, 50).max(axis=(3, 5))
    assert y2.shape == (1, 3, 2, 3), y2.shape
    assert jnp.allclose(y2, ref2), float(jnp.max(jnp.abs(y2 - ref2)))

    print("KERNEL_OK")
</pallas_src>

<mosaic_0001>
module attributes {stable_mosaic.version = 11 : i64} {
  func.func @_maxpool_strip_kernel(%arg0: i32, %arg1: memref<16x50x100xf32, #tpu.memory_space<vmem>>, %arg2: memref<16x2xf32, #tpu.memory_space<vmem>>) attributes {dimension_semantics = [#tpu.dimension_semantics<parallel>], iteration_bounds = array<i64: 1>, scalar_prefetch = 0 : i64, scratch_operands = 0 : i64, tpu.core_type = #tpu.core_type<tc>, window_params = [{transform_indices = @transform_0, window_bounds = array<i64: 16, 50, 100>}, {transform_indices = @transform_1, window_bounds = array<i64: 16, 2>}]} {
    %c0 = arith.constant 0 : index
    %c0_0 = arith.constant 0 : index
    %c0_1 = arith.constant 0 : index
    %0 = vector.load %arg1[%c0, %c0_0, %c0_1] : memref<16x50x100xf32, #tpu.memory_space<vmem>>, vector<16x50x100xf32>
    %cst = arith.constant dense<0xFF800000> : vector<16x100xf32>
    %1 = vector.multi_reduction <maximumf>, %0, %cst [1] : vector<16x50x100xf32> to vector<16x100xf32>
    %2 = vector.extract_strided_slice %1 {offsets = [0, 0], sizes = [16, 50], strides = [1, 1]} : vector<16x100xf32> to vector<16x50xf32>
    %cst_2 = arith.constant dense<0xFF800000> : vector<16xf32>
    %3 = vector.multi_reduction <maximumf>, %2, %cst_2 [1] : vector<16x50xf32> to vector<16xf32>
    %4 = vector.shape_cast %3 : vector<16xf32> to vector<16x1xf32>
    %c0_3 = arith.constant 0 : index
    %c0_4 = arith.constant 0 : index
    %5 = vector.load %arg2[%c0_3, %c0_4] : memref<16x2xf32, #tpu.memory_space<vmem>>, vector<16x1xf32>
    tpu.vector_store %arg2[%c0_3, %c0_4], %4 {strides = array<i32>} : memref<16x2xf32, #tpu.memory_space<vmem>>, vector<16x1xf32>,
    %6 = vector.extract_strided_slice %1 {offsets = [0, 50], sizes = [16, 50], strides = [1, 1]} : vector<16x100xf32> to vector<16x50xf32>
    %cst_5 = arith.constant dense<0xFF800000> : vector<16xf32>
    %7 = vector.multi_reduction <maximumf>, %6, %cst_5 [1] : vector<16x50xf32> to vector<16xf32>
    %8 = vector.shape_cast %7 : vector<16xf32> to vector<16x1xf32>
    %c0_6 = arith.constant 0 : index
    %c1 = arith.constant 1 : index
    %9 = vector.load %arg2[%c0_6, %c1] : memref<16x2xf32, #tpu.memory_space<vmem>>, vector<16x1xf32>
    tpu.vector_store %arg2[%c0_6, %c1], %8 {strides = array<i32>} : memref<16x2xf32, #tpu.memory_space<vmem>>, vector<16x1xf32>,
    return
  }
  func.func @transform_0(%arg0: i32) -> (i32, i32, i32) {
    %c0_i32 = arith.constant 0 : i32
    %c0_i32_0 = arith.constant 0 : i32
    %c0_i32_1 = arith.constant 0 : i32
    return %arg0, %c0_i32, %c0_i32_0 : i32, i32, i32
  }
  func.func @transform_1(%arg0: i32) -> (i32, i32) {
    %c0_i32 = arith.constant 0 : i32
    %c0_i32_0 = arith.constant 0 : i32
    return %arg0, %c0_i32 : i32, i32
  }
}

</mosaic_0001>

<llo_original>
// kernel: downsize_block_forward.1
$region0: #{downsize_block_forward.1}
  #allocation0 [shape = 'u32[]', space=smem, size = 0x4, offset = 0x4, fixed_abs, tag = 'smem constant byte address 0x4 - core index']
  #allocation1 [shape = 'u32[144,128]{1,0:T(1,128)}', space=vmem, size = 0x12000, scoped, tag = 'internal scratch']
  %s0 = inlined_call_operand.vmem [shape: f32[16,50,100], index: 0, kind: input, shape index: {}]
  %s1 = inlined_call_operand.vmem [shape: f32[16,2], index: 1, kind: output, shape index: {}]
  %s2 = sld [smem:[#allocation0]]
  $region14: #{downsize_block_forward.1} parent=0
    _
  %s4 = ssub.s32 1, %s2
  %s5 = scalar_select 0, %s4, %s2
  // Predicated region
  $region2: #{downsize_block_forward.1} parent=0 // pred_check
    _
  $region3: #{downsize_block_forward.1} parent=0 // pred_check_branch
    %7 = sbr.rel (0) target = $region5
  $region4: #{downsize_block_forward.1} parent=0 // pred_region
    _
  $region5: #{downsize_block_forward.1} parent=0 // pred_fallthru
    _
  %v8 = vld [vmem:[%s0] sm:$0xff]
  %v9 = vld [vmem:[%s0 + $0x8] sm:$0xff]
  %v10 = vld [vmem:[%s0 + $0x10] sm:$0xff]
  %v11 = vld [vmem:[%s0 + $0x18] sm:$0xff]
  %v12 = vld [vmem:[%s0 + $0x20] sm:$0xff]
  %v13 = vld [vmem:[%s0 + $0x28] sm:$0xff]
  %v14 = vld [vmem:[%s0 + $0x30] sm:$0x3]
  %v15 = vld [vmem:[%s0 + $0x38] sm:$0xff]
  %v16 = vld [vmem:[%s0 + $0x40] sm:$0xff]
  %v17 = vld [vmem:[%s0 + $0x48] sm:$0xff]
  %v18 = vld [vmem:[%s0 + $0x50] sm:$0xff]
  %v19 = vld [vmem:[%s0 + $0x58] sm:$0xff]
  %v20 = vld [vmem:[%s0 + $0x60] sm:$0xff]
  %v21 = vld [vmem:[%s0 + $0x68] sm:$0x3]
  %v22 = vld [vmem:[%s0 + $0x70] sm:$0xff]
  %v23 = vld [vmem:[%s0 + $0x78] sm:$0xff]
  %v24 = vld [vmem:[%s0 + $0x80] sm:$0xff]
  %v25 = vld [vmem:[%s0 + $0x88] sm:$0xff]
  %v26 = vld [vmem:[%s0 + $0x90] sm:$0xff]
  %v27 = vld [vmem:[%s0 + $0x98] sm:$0xff]
  %v28 = vld [vmem:[%s0 + $0xa0] sm:$0x3]
  %v29 = vld [vmem:[%s0 + $0xa8] sm:$0xff]
  %v30 = vld [vmem:[%s0 + $0xb0] sm:$0xff]
  %v31 = vld [vmem:[%s0 + $0xb8] sm:$0xff]
  %v32 = vld [vmem:[%s0 + $0xc0] sm:$0xff]
  %v33 = vld [vmem:[%s0 + $0xc8] sm:$0xff]
  %v34 = vld [vmem:[%s0 + $0xd0] sm:$0xff]
  %v35 = vld [vmem:[%s0 + $0xd8] sm:$0x3]
  %v36 = vld [vmem:[%s0 + $0xe0] sm:$0xff]
  %v37 = vld [vmem:[%s0 + $0xe8] sm:$0xff]
  %v38 = vld [vmem:[%s0 + $0xf0] sm:$0xff]
  %v39 = vld [vmem:[%s0 + $0xf8] sm:$0xff]
  %v40 = vld [vmem:[%s0 + $0x100] sm:$0xff]
  %v41 = vld [vmem:[%s0 + $0x108] sm:$0xff]
  %v42 = vld [vmem:[%s0 + $0x110] sm:$0x3]
  %v43 = vld [vmem:[%s0 + $0x118] sm:$0xff]
  %v44 = vld [vmem:[%s0 + $0x120] sm:$0xff]
  %v45 = vld [vmem:[%s0 + $0x128] sm:$0xff]
  %v46 = vld [vmem:[%s0 + $0x130] sm:$0xff]
  %v47 = vld [vmem:[%s0 + $0x138] sm:$0xff]
  %v48 = vld [vmem:[%s0 + $0x140] sm:$0xff]
  %v49 = vld [vmem:[%s0 + $0x148] sm:$0x3]
  %v50 = vld [vmem:[%s0 + $0x150] sm:$0xff]
  %v51 = vld [vmem:[%s0 + $0x158] sm:$0xff]
  %v52 = vld [vmem:[%s0 + $0x160] sm:$0xff]
  %v53 = vld [vmem:[%s0 + $0x168] sm:$0xff]
  %v54 = vld [vmem:[%s0 + $0x170] sm:$0xff]
  %v55 = vld [vmem:[%s0 + $0x178] sm:$0xff]
  %v56 = vld [vmem:[%s0 + $0x180] sm:$0x3]
  %v57 = vld [vmem:[%s0 + $0x188] sm:$0xff]
  %v58 = vld [vmem:[%s0 + $0x190] sm:$0xff]
  %v59 = vld [vmem:[%s0 + $0x198] sm:$0xff]
  %v60 = vld [vmem:[%s0 + $0x1a0] sm:$0xff]
  %v61 = vld [vmem:[%s0 + $0x1a8] sm:$0xff]
  %v62 = vld [vmem:[%s0 + $0x1b0] sm:$0xff]
  %v63 = vld [vmem:[%s0 + $0x1b8] sm:$0x3]
  %v64 = vld [vmem:[%s0 + $0x1c0] sm:$0xff]
  %v65 = vld [vmem:[%s0 + $0x1c8] sm:$0xff]
  %v66 = vld [vmem:[%s0 + $0x1d0] sm:$0xff]
  %v67 = vld [vmem:[%s0 + $0x1d8] sm:$0xff]
  %v68 = vld [vmem:[%s0 + $0x1e0] sm:$0xff]
  %v69 = vld [vmem:[%s0 + $0x1e8] sm:$0xff]
  %v70 = vld [vmem:[%s0 + $0x1f0] sm:$0x3]
  %v71 = vld [vmem:[%s0 + $0x1f8] sm:$0xff]
  %v72 = vld [vmem:[%s0 + $0x200] sm:$0xff]
  %v73 = vld [vmem:[%s0 + $0x208] sm:$0xff]
  %v74 = vld [vmem:[%s0 + $0x210] sm:$0xff]
  %v75 = vld [vmem:[%s0 + $0x218] sm:$0xff]
  %v76 = vld [vmem:[%s0 + $0x220] sm:$0xff]
  %v77 = vld [vmem:[%s0 + $0x228] sm:$0x3]
  %v78 = vld [vmem:[%s0 + $0x230] sm:$0xff]
  %v79 = vld [vmem:[%s0 + $0x238] sm:$0xff]
  %v80 = vld [vmem:[%s0 + $0x240] sm:$0xff]
  %v81 = vld [vmem:[%s0 + $0x248] sm:$0xff]
  %v82 = vld [vmem:[%s0 + $0x250] sm:$0xff]
  %v83 = vld [vmem:[%s0 + $0x258] sm:$0xff]
  %v84 = vld [vmem:[%s0 + $0x260] sm:$0x3]
  %v85 = vld [vmem:[%s0 + $0x268] sm:$0xff]
  %v86 = vld [vmem:[%s0 + $0x270] sm:$0xff]
  %v87 = vld [vmem:[%s0 + $0x278] sm:$0xff]
  %v88 = vld [vmem:[%s0 + $0x280] sm:$0xff]
  %v89 = vld [vmem:[%s0 + $0x288] sm:$0xff]
  %v90 = vld [vmem:[%s0 + $0x290] sm:$0xff]
  %v91 = vld [vmem:[%s0 + $0x298] sm:$0x3]
  %v92 = vld [vmem:[%s0 + $0x2a0] sm:$0xff]
  %v93 = vld [vmem:[%s0 + $0x2a8] sm:$0xff]
  %v94 = vld [vmem:[%s0 + $0x2b0] sm:$0xff]
  %v95 = vld [vmem:[%s0 + $0x2b8] sm:$0xff]
  %v96 = vld [vmem:[%s0 + $0x2c0] sm:$0xff]
  %v97 = vld [vmem:[%s0 + $0x2c8] sm:$0xff]
  %v98 = vld [vmem:[%s0 + $0x2d0] sm:$0x3]
  %v99 = vld [vmem:[%s0 + $0x2d8] sm:$0xff]
  %v100 = vld [vmem:[%s0 + $0x2e0] sm:$0xff]
  %v101 = vld [vmem:[%s0 + $0x2e8] sm:$0xff]
  %v102 = vld [vmem:[%s0 + $0x2f0] sm:$0xff]
  %v103 = vld [vmem:[%s0 + $0x2f8] sm:$0xff]
  %v104 = vld [vmem:[%s0 + $0x300] sm:$0xff]
  %v105 = vld [vmem:[%s0 + $0x308] sm:$0x3]
  %v106 = vld [vmem:[%s0 + $0x310] sm:$0xff]
  %v107 = vld [vmem:[%s0 + $0x318] sm:$0xff]
  %v108 = vld [vmem:[%s0 + $0x320] sm:$0xff]
  %v109 = vld [vmem:[%s0 + $0x328] sm:$0xff]
  %v110 = vld [vmem:[%s0 + $0x330] sm:$0xff]
  %v111 = vld [vmem:[%s0 + $0x338] sm:$0xff]
  %v112 = vld [vmem:[%s0 + $0x340] sm:$0x3]
  %v113 = vld [vmem:[%s0 + $0x348] sm:$0xff]
  %v114 = vld [vmem:[%s0 + $0x350] sm:$0xff]
  %v115 = vld [vmem:[%s0 + $0x358] sm:$0xff]
  %v116 = vld [vmem:[%s0 + $0x360] sm:$0xff]
  %v117 = vld [vmem:[%s0 + $0x368] sm:$0xff]
  %v118 = vld [vmem:[%s0 + $0x370] sm:$0xff]
  %v119 = vld [vmem:[%s0 + $0x378] sm:$0x3]
  %vm120 = vcmask 818176
  %v121 = vsel %vm120, %v8, -inf
  %v122 = vsel %vm120, %v9, -inf
  %v123 = vmax.f32 %v121, %v122
  %v124 = vsel %vm120, %v10, -inf
  %v125 = vmax.f32 %v123, %v124
  %v126 = vsel %vm120, %v11, -inf
  %v127 = vmax.f32 %v125, %v126
  %v128 = vsel %vm120, %v12, -inf
  %v129 = vmax.f32 %v127, %v128
  %v130 = vsel %vm120, %v13, -inf
  %v131 = vmax.f32 %v129, %v130
  %vm132 = vcmask 812032
  %v133 = vsel %vm132, %v14, -inf
  %v134 = vmax.f32 %v131, %v133
  %v135 = vrot.slane %v134, 4
  %v136 = vmax.f32 %v134, %v135
  %v137 = vrot.slane %v136, 2
  %v138 = vmax.f32 %v136, %v137
  %v139 = vrot.slane %v138, 1
  %v140 = vmax.f32 %v138, %v139
  %v141 = vsel %vm120, %v15, -inf
  %v142 = vsel %vm120, %v16, -inf
  %v143 = vmax.f32 %v141, %v142
  %v144 = vsel %vm120, %v17, -inf
  %v145 = vmax.f32 %v143, %v144
  %v146 = vsel %vm120, %v18, -inf
  %v147 = vmax.f32 %v145, %v146
  %v148 = vsel %vm120, %v19, -inf
  %v149 = vmax.f32 %v147, %v148
  %v150 = vsel %vm120, %v20, -inf
  %v151 = vmax.f32 %v149, %v150
  %v152 = vsel %vm132, %v21, -inf
  %v153 = vmax.f32 %v151, %v152
  %v154 = vrot.slane %v153, 4
  %v155 = vmax.f32 %v153, %v154
  %v156 = vrot.slane %v155, 2
  %v157 = vmax.f32 %v155, %v156
  %v158 = vrot.slane %v157, 1
  %v159 = vmax.f32 %v157, %v158
  %v160 = vsel %vm120, %v22, -inf
  %v161 = vsel %vm120, %v23, -inf
  %v162 = vmax.f32 %v160, %v161
  %v163 = vsel %vm120, %v24, -inf
  %v164 = vmax.f32 %v162, %v163
  %v165 = vsel %vm120, %v25, -inf
  %v166 = vmax.f32 %v164, %v165
  %v167 = vsel %vm120, %v26, -inf
  %v168 = vmax.f32 %v166, %v167
  %v169 = vsel %vm120, %v27, -inf
  %v170 = vmax.f32 %v168, %v169
  %v171 = vsel %vm132, %v28, -inf
  %v172 = vmax.f32 %v170, %v171
  %v173 = vrot.slane %v172, 4
  %v174 = vmax.f32 %v172, %v173
  %v175 = vrot.slane %v174, 2
  %v176 = vmax.f32 %v174, %v175
  %v177 = vrot.slane %v176, 1
  %v178 = vmax.f32 %v176, %v177
  %v179 = vsel %vm120, %v29, -inf
  %v180 = vsel %vm120, %v30, -inf
  %v181 = vmax.f32 %v179, %v180
  %v182 = vsel %vm120, %v31, -inf
  %v183 = vmax.f32 %v181, %v182
  %v184 = vsel %vm120, %v32, -inf
  %v185 = vmax.f32 %v183, %v184
  %v186 = vsel %vm120, %v33, -inf
  %v187 = vmax.f32 %v185, %v186
  %v188 = vsel %vm120, %v34, -inf
  %v189 = vmax.f32 %v187, %v188
  %v190 = vsel %vm132, %v35, -inf
  %v191 = vmax.f32 %v189, %v190
  %v192 = vrot.slane %v191, 4
  %v193 = vmax.f32 %v191, %v192
  %v194 = vrot.slane %v193, 2
  %v195 = vmax.f32 %v193, %v194
  %v196 = vrot.slane %v195, 1
  %v197 = vmax.f32 %v195, %v196
  %v198 = vsel %vm120, %v36, -inf
  %v199 = vsel %vm120, %v37, -inf
  %v200 = vmax.f32 %v198, %v199
  %v201 = vsel %vm120, %v38, -inf
  %v202 = vmax.f32 %v200, %v201
  %v203 = vsel %vm120, %v39, -inf
  %v204 = vmax.f32 %v202, %v203
  %v205 = vsel %vm120, %v40, -inf
  %v206 = vmax.f32 %v204, %v205
  %v207 = vsel %vm120, %v41, -inf
  %v208 = vmax.f32 %v206, %v207
  %v209 = vsel %vm132, %v42, -inf
  %v210 = vmax.f32 %v208, %v209
  %v211 = vrot.slane %v210, 4
  %v212 = vmax.f32 %v210, %v211
  %v213 = vrot.slane %v212, 2
  %v214 = vmax.f32 %v212, %v213
  %v215 = vrot.slane %v214, 1
  %v216 = vmax.f32 %v214, %v215
  %v217 = vsel %vm120, %v43, -inf
  %v218 = vsel %vm120, %v44, -inf
  %v219 = vmax.f32 %v217, %v218
  %v220 = vsel %vm120, %v45, -inf
  %v221 = vmax.f32 %v219, %v220
  %v222 = vsel %vm120, %v46, -inf
  %v223 = vmax.f32 %v221, %v222
  %v224 = vsel %vm120, %v47, -inf
  %v225 = vmax.f32 %v223, %v224
  %v226 = vsel %vm120, %v48, -inf
  %v227 = vmax.f32 %v225, %v226
  %v228 = vsel %vm132, %v49, -inf
  %v229 = vmax.f32 %v227, %v228
  %v230 = vrot.slane %v229, 4
  %v231 = vmax.f32 %v229, %v230
  %v232 = vrot.slane %v231, 2
  %v233 = vmax.f32 %v231, %v232
  %v234 = vrot.slane %v233, 1
  %v235 = vmax.f32 %v233, %v234
  %v236 = vsel %vm120, %v50, -inf
  %v237 = vsel %vm120, %v51, -inf
  %v238 = vmax.f32 %v236, %v237
  %v239 = vsel %vm120, %v52, -inf
  %v240 = vmax.f32 %v238, %v239
  %v241 = vsel %vm120, %v53, -inf
  %v242 = vmax.f32 %v240, %v241
  %v243 = vsel %vm120, %v54, -inf
  %v244 = vmax.f32 %v242, %v243
  %v245 = vsel %vm120, %v55, -inf
  %v246 = vmax.f32 %v244, %v245
  %v247 = vsel %vm132, %v56, -inf
  %v248 = vmax.f32 %v246, %v247
  %v249 = vrot.slane %v248, 4
  %v250 = vmax.f32 %v248, %v249
  %v251 = vrot.slane %v250, 2
  %v252 = vmax.f32 %v250, %v251
  %v253 = vrot.slane %v252, 1
  %v254 = vmax.f32 %v252, %v253
  %v255 = vsel %vm120, %v57, -inf
  %v256 = vsel %vm120, %v58, -inf
  %v257 = vmax.f32 %v255, %v256
  %v258 = vsel %vm120, %v59, -inf
  %v259 = vmax.f32 %v257, %v258
  %v260 = vsel %vm120, %v60, -inf
  %v261 = vmax.f32 %v259, %v260
  %v262 = vsel %vm120, %v61, -inf
  %v263 = vmax.f32 %v261, %v262
  %v264 = vsel %vm120, %v62, -inf
  %v265 = vmax.f32 %v263, %v264
  %v266 = vsel %vm132, %v63, -inf
  %v267 = vmax.f32 %v265, %v266
  %v268 = vrot.slane %v267, 4
  %v269 = vmax.f32 %v267, %v268
  %v270 = vrot.slane %v269, 2
  %v271 = vmax.f32 %v269, %v270
  %v272 = vrot.slane %v271, 1
  %v273 = vmax.f32 %v271, %v272
  %v274 = vsel %vm120, %v64, -inf
  %v275 = vsel %vm120, %v65, -inf
  %v276 = vmax.f32 %v274, %v275
  %v277 = vsel %vm120, %v66, -inf
  %v278 = vmax.f32 %v276, %v277
  %v279 = vsel %vm120, %v67, -inf
  %v280 = vmax.f32 %v278, %v279
  %v281 = vsel %vm120, %v68, -inf
  %v282 = vmax.f32 %v280, %v281
  %v283 = vsel %vm120, %v69, -inf
  %v284 = vmax.f32 %v282, %v283
  %v285 = vsel %vm132, %v70, -inf
  %v286 = vmax.f32 %v284, %v285
  %v287 = vrot.slane %v286, 4
  %v288 = vmax.f32 %v286, %v287
  %v289 = vrot.slane %v288, 2
  %v290 = vmax.f32 %v288, %v289
  %v291 = vrot.slane %v290, 1
  %v292 = vmax.f32 %v290, %v291
  %v293 = vsel %vm120, %v71, -inf
  %v294 = vsel %vm120, %v72, -inf
  %v295 = vmax.f32 %v293, %v294
  %v296 = vsel %vm120, %v73, -inf
  %v297 = vmax.f32 %v295, %v296
  %v298 = vsel %vm120, %v74, -inf
  %v299 = vmax.f32 %v297, %v298
  %v300 = vsel %vm120, %v75, -inf
  %v301 = vmax.f32 %v299, %v300
  %v302 = vsel %vm120, %v76, -inf
  %v303 = vmax.f32 %v301, %v302
  %v304 = vsel %vm132, %v77, -inf
  %v305 = vmax.f32 %v303, %v304
  %v306 = vrot.slane %v305, 4
  %v307 = vmax.f32 %v305, %v306
  %v308 = vrot.slane %v307, 2
  %v309 = vmax.f32 %v307, %v308
  %v310 = vrot.slane %v309, 1
  %v311 = vmax.f32 %v309, %v310
  %v312 = vsel %vm120, %v78, -inf
  %v313 = vsel %vm120, %v79, -inf
  %v314 = vmax.f32 %v312, %v313
  %v315 = vsel %vm120, %v80, -inf
  %v316 = vmax.f32 %v314, %v315
  %v317 = vsel %vm120, %v81, -inf
  %v318 = vmax.f32 %v316, %v317
  %v319 = vsel %vm120, %v82, -inf
  %v320 = vmax.f32 %v318, %v319
  %v321 = vsel %vm120, %v83, -inf
  %v322 = vmax.f32 %v320, %v321
  %v323 = vsel %vm132, %v84, -inf
  %v324 = vmax.f32 %v322, %v323
  %v325 = vrot.slane %v324, 4
  %v326 = vmax.f32 %v324, %v325
  %v327 = vrot.slane %v326, 2
  %v328 = vmax.f32 %v326, %v327
  %v329 = vrot.slane %v328, 1
  %v330 = vmax.f32 %v328, %v329
  %v331 = vsel %vm120, %v85, -inf
  %v332 = vsel %vm120, %v86, -inf
  %v333 = vmax.f32 %v331, %v332
  %v334 = vsel %vm120, %v87, -inf
  %v335 = vmax.f32 %v333, %v334
  %v336 = vsel %vm120, %v88, -inf
  %v337 = vmax.f32 %v335, %v336
  %v338 = vsel %vm120, %v89, -inf
  %v339 = vmax.f32 %v337, %v338
  %v340 = vsel %vm120, %v90, -inf
  %v341 = vmax.f32 %v339, %v340
  %v342 = vsel %vm132, %v91, -inf
  %v343 = vmax.f32 %v341, %v342
  %v344 = vrot.slane %v343, 4
  %v345 = vmax.f32 %v343, %v344
  %v346 = vrot.slane %v345, 2
  %v347 = vmax.f32 %v345, %v346
  %v348 = vrot.slane %v347, 1
  %v349 = vmax.f32 %v347, %v348
  %v350 = vsel %vm120, %v92, -inf
  %v351 = vsel %vm120, %v93, -inf
  %v352 = vmax.f32 %v350, %v351
  %v353 = vsel %vm120, %v94, -inf
  %v354 = vmax.f32 %v352, %v353
  %v355 = vsel %vm120, %v95, -inf
  %v356 = vmax.f32 %v354, %v355
  %v357 = vsel %vm120, %v96, -inf
  %v358 = vmax.f32 %v356, %v357
  %v359 = vsel %vm120, %v97, -inf
  %v360 = vmax.f32 %v358, %v359
  %v361 = vsel %vm132, %v98, -inf
  %v362 = vmax.f32 %v360, %v361
  %v363 = vrot.slane %v362, 4
  %v364 = vmax.f32 %v362, %v363
  %v365 = vrot.slane %v364, 2
  %v366 = vmax.f32 %v364, %v365
  %v367 = vrot.slane %v366, 1
  %v368 = vmax.f32 %v366, %v367
  %v369 = vsel %vm120, %v99, -inf
  %v370 = vsel %vm120, %v100, -inf
  %v371 = vmax.f32 %v369, %v370
  %v372 = vsel %vm120, %v101, -inf
  %v373 = vmax.f32 %v371, %v372
  %v374 = vsel %vm120, %v102, -inf
  %v375 = vmax.f32 %v373, %v374
  %v376 = vsel %vm120, %v103, -inf
  %v377 = vmax.f32 %v375, %v376
  %v378 = vsel %vm120, %v104, -inf
  %v379 = vmax.f32 %v377, %v378
  %v380 = vsel %vm132, %v105, -inf
  %v381 = vmax.f32 %v379, %v380
  %v382 = vrot.slane %v381, 4
  %v383 = vmax.f32 %v381, %v382
  %v384 = vrot.slane %v383, 2
  %v385 = vmax.f32 %v383, %v384
  %v386 = vrot.slane %v385, 1
  %v387 = vmax.f32 %v385, %v386
  %v388 = vsel %vm120, %v106, -inf
  %v389 = vsel %vm120, %v107, -inf
  %v390 = vmax.f32 %v388, %v389
  %v391 = vsel %vm120, %v108, -inf
  %v392 = vmax.f32 %v390, %v391
  %v393 = vsel %vm120, %v109, -inf
  %v394 = vmax.f32 %v392, %v393
  %v395 = vsel %vm120, %v110, -inf
  %v396 = vmax.f32 %v394, %v395
  %v397 = vsel %vm120, %v111, -inf
  %v398 = vmax.f32 %v396, %v397
  %v399 = vsel %vm132, %v112, -inf
  %v400 = vmax.f32 %v398, %v399
  %v401 = vrot.slane %v400, 4
  %v402 = vmax.f32 %v400, %v401
  %v403 = vrot.slane %v402, 2
  %v404 = vmax.f32 %v402, %v403
  %v405 = vrot.slane %v404, 1
  %v406 = vmax.f32 %v404, %v405
  %v407 = vsel %vm120, %v113, -inf
  %v408 = vsel %vm120, %v114, -inf
  %v409 = vmax.f32 %v407, %v408
  %v410 = vsel %vm120, %v115, -inf
  %v411 = vmax.f32 %v409, %v410
  %v412 = vsel %vm120, %v116, -inf
  %v413 = vmax.f32 %v411, %v412
  %v414 = vsel %vm120, %v117, -inf
  %v415 = vmax.f32 %v413, %v414
  %v416 = vsel %vm120, %v118, -inf
  %v417 = vmax.f32 %v415, %v416
  %v418 = vsel %vm132, %v119, -inf
  %v419 = vmax.f32 %v417, %v418
  %v420 = vrot.slane %v419, 4
  %v421 = vmax.f32 %v419, %v420
  %v422 = vrot.slane %v421, 2
  %v423 = vmax.f32 %v421, %v422
  %v424 = vrot.slane %v423, 1
  %v425 = vmax.f32 %v423, %v424
  %vm442 = vcmask 1041409
  %v443 = vsel %vm442, %v159, %v140
  %vm444 = vcmask 1042434
  %v445 = vsel %vm444, %v178, %v443
  %vm446 = vcmask 1043459
  %v447 = vsel %vm446, %v197, %v445
  %vm448 = vcmask 1044484
  %v449 = vsel %vm448, %v216, %v447
  %vm450 = vcmask 1045509
  %v451 = vsel %vm450, %v235, %v449
  %vm452 = vcmask 1046534
  %v453 = vsel %vm452, %v254, %v451
  %vm454 = vcmask 1047559
  %v455 = vsel %vm454, %v273, %v453
  %v456 = vsel %vm442, %v311, %v292
  %v457 = vsel %vm444, %v330, %v456
  %v458 = vsel %vm446, %v349, %v457
  %v459 = vsel %vm448, %v368, %v458
  %v460 = vsel %vm450, %v387, %v459
  %v461 = vsel %vm452, %v406, %v460
  %v462 = vsel %vm454, %v425, %v461
  %vm465 = vcmask 408576
  %v466 = vsel %vm465, %v455, -inf
  %467 = vmax.xlane.f32.xlu0 %v466
  %v468 = vpop.xlane.xlu0 %467
  %v469 = vsel %vm465, %v462, -inf
  %470 = vmax.xlane.f32.xlu0 %v469
  %v471 = vpop.xlane.xlu0 %470
  %vm472 = vcmask 7168
  %473 = vst.msk [vmem:[%s1] sm:$0xff] %vm472, %v468
  %474 = vst.msk [vmem:[%s1 + $0x8] sm:$0xff] %vm472, %v471
  %vm475 = vcmask 818576
  %v476 = vsel %vm475, %v455, -inf
  %477 = vmax.xlane.f32.xlu0 %v476
  %v478 = vpop.xlane.xlu0 %477
  %v479 = vsel %vm475, %v462, -inf
  %480 = vmax.xlane.f32.xlu0 %v479
  %v481 = vpop.xlane.xlu0 %480
  %vm482 = vcmask 15368
  %483 = vst.msk [vmem:[%s1] sm:$0xff] %vm482, %v478
  %484 = vst.msk [vmem:[%s1 + $0x8] sm:$0xff] %vm482, %v481
  // Predicated region
  $region6: #{downsize_block_forward.1} parent=0 // pred_check
    _
  $region7: #{downsize_block_forward.1} parent=0 // pred_check_branch
    %486 = sbr.rel (0) target = $region9
  $region8: #{downsize_block_forward.1} parent=0 // pred_region
    _
  $region9: #{downsize_block_forward.1} parent=0 // pred_fallthru
    _
  // Predicated region
  $region10: #{downsize_block_forward.1} parent=0 // pred_check
    _
  $region11: #{downsize_block_forward.1} parent=0 // pred_check_branch
    %488 = sbr.rel (0) target = $region13
  $region12: #{downsize_block_forward.1} parent=0 // pred_region
    _
  $region13: #{downsize_block_forward.1} parent=0 // pred_fallthru
    _

</llo_original>
